<compile_context>
chip_gen: v7x
topology: tpu7x:2x2x1
jax: 0.10.0
libtpu: 0.0.40
codegen_flags: <defaults>
</compile_context>

<pallas_src>
import jax
import jax.numpy as jnp
from jax.experimental import pallas as pl
from jax.experimental.pallas import tpu as pltpu


def _channel_attn_kernel(x_ref, w1_ref, b1_ref, w2_ref, b2_ref, o_ref):
    # x_ref: (Bt, C, HW) block covering Bt batch elements (full channel/spatial extent).
    x = x_ref[...]
    xf = x.astype(jnp.float32)

    bt = xf.shape[0]
    hw = xf.shape[-1]

    # Global pooling over the spatial (lane) axis, accumulated in f32.
    avg = jnp.sum(xf, axis=-1) * (1.0 / float(hw))      # (Bt, C)
    mx = jnp.max(xf, axis=-1)                           # (Bt, C)

    # Single fused MLP pass over both pooled paths.
    pooled = jnp.concatenate([avg, mx], axis=0)         # (2*Bt, C)

    w1 = w1_ref[...].astype(jnp.float32)                # (C, Ch)
    b1 = b1_ref[...].astype(jnp.float32)                # (1, Ch)
    w2 = w2_ref[...].astype(jnp.float32)                # (Ch, C)
    b2 = b2_ref[...].astype(jnp.float32)                # (1, C)

    h = jnp.dot(pooled, w1, preferred_element_type=jnp.float32) + b1
    h = jnp.maximum(h, 0.0)                             # ReLU
    y = jnp.dot(h, w2, preferred_element_type=jnp.float32) + b2  # (2*Bt, C)

    attn = jax.nn.sigmoid(y[:bt] + y[bt:])              # (Bt, C)

    # Broadcast scale over HW; cast back to the I/O dtype.
    o_ref[...] = (xf * attn[:, :, None]).astype(o_ref.dtype)


def _pick_batch_tile(B, C, HW, itemsize, vmem_budget_bytes):
    """Largest divisor of B whose double-buffered block footprint fits the budget."""
    # 2x input + 2x output double buffers per grid step.
    per_image = 4 * C * HW * itemsize
    max_bt = max(1, vmem_budget_bytes // per_image)
    target = int(min(max_bt, 8, B))
    bt = max(d for d in range(1, target + 1) if B % d == 0)
    # Prefer >= 2 grid steps so both TensorCores (v7x) get work.
    if B > 1 and B // bt < 2:
        candidates = [d for d in range(1, bt) if B % d == 0 and B // d >= 2]
        if candidates:
            bt = max(candidates)
    return bt


def channel_attn(x, w1, b1, w2, b2, *, vmem_budget_bytes=24 * 1024 * 1024):
    """x: (B, C, H, W) float32/bfloat16.

    Weights are PyTorch Linear params passed pre-transposed:
      w1 = fc1.weight.T  (C, Ch),   b1 = fc1.bias  (Ch,)
      w2 = fc2.weight.T  (Ch, C),   b2 = fc2.bias  (C,)
    """
    B, C, H, W = x.shape
    HW = H * W
    Ch = w1.shape[1]
    itemsize = jnp.dtype(x.dtype).itemsize

    x_flat = x.reshape(B, C, HW)

    b1_2d = b1.reshape(1, Ch)
    b2_2d = b2.reshape(1, C)

    bt = _pick_batch_tile(B, C, HW, itemsize, vmem_budget_bytes)
    grid = (B // bt,)

    # VMEM limit sized from the actual block footprint (with headroom), capped
    # at the 128 MiB physical ceiling of v5e/v6e (v7x clamps to its 64 MiB).
    block_bytes = bt * C * HW * itemsize
    weight_bytes = (2 * C * Ch + C + Ch) * 4
    vmem_limit = min(
        128 * 1024 * 1024,
        max(32 * 1024 * 1024, 4 * block_bytes + 2 * weight_bytes + (4 << 20)),
    )

    flops = 2 * 2 * (2 * B) * C * Ch + B * C * HW        # fused MLP + scale pass
    bytes_accessed = 2 * B * C * HW * itemsize + weight_bytes
    transcendentals = B * C                               # sigmoid

    out_flat = pl.pallas_call(
        _channel_attn_kernel,
        out_shape=jax.ShapeDtypeStruct((B, C, HW), x.dtype),
        grid_spec=pltpu.PrefetchScalarGridSpec(
            num_scalar_prefetch=0,
            grid=grid,
            in_specs=[
                pl.BlockSpec((bt, C, HW), lambda b: (b, 0, 0)),
                pl.BlockSpec((C, Ch), lambda b: (0, 0)),
                pl.BlockSpec((1, Ch), lambda b: (0, 0)),
                pl.BlockSpec((Ch, C), lambda b: (0, 0)),
                pl.BlockSpec((1, C), lambda b: (0, 0)),
            ],
            out_specs=pl.BlockSpec((bt, C, HW), lambda b: (b, 0, 0)),
        ),
        compiler_params=pltpu.CompilerParams(
            dimension_semantics=("parallel",),
            vmem_limit_bytes=vmem_limit,
        ),
        cost_estimate=pl.CostEstimate(
            flops=flops,
            transcendentals=transcendentals,
            bytes_accessed=bytes_accessed,
        ),
    )(x_flat, w1, b1_2d, w2, b2_2d)

    return out_flat.reshape(B, C, H, W)


def _reference(x, w1, b1, w2, b2):
    # Pure-JAX reference mirroring the PyTorch forward.
    avg = jnp.mean(x, axis=(2, 3))                 # (B, C)
    mx = jnp.max(x, axis=(2, 3))                   # (B, C)

    def mlp(v):
        h = jnp.maximum(v @ w1 + b1, 0.0)
        return h @ w2 + b2

    attn = jax.nn.sigmoid(mlp(avg) + mlp(mx))[:, :, None, None]
    return x * attn


if __name__ == "__main__":
    # Small shapes: C must be a multiple of reduction_ratio=16 -> C=32, hidden=2.
    B, C, H, W = 2, 32, 16, 16
    reduction_ratio = 16
    Ch = C // reduction_ratio

    key = jax.random.PRNGKey(0)
    kx, k1, k2, k3, k4 = jax.random.split(key, 5)

    x = jax.random.normal(kx, (B, C, H, W), dtype=jnp.float32)

    # PyTorch Linear params stored pre-transposed as (in, out).
    w1 = jax.random.normal(k1, (C, Ch), dtype=jnp.float32) * 0.1   # fc1.weight.T
    b1 = jax.random.normal(k2, (Ch,), dtype=jnp.float32) * 0.1     # fc1.bias
    w2 = jax.random.normal(k3, (Ch, C), dtype=jnp.float32) * 0.1   # fc2.weight.T
    b2 = jax.random.normal(k4, (C,), dtype=jnp.float32) * 0.1      # fc2.bias

    out = jax.block_until_ready(channel_attn(x, w1, b1, w2, b2))
    ref = _reference(x, w1, b1, w2, b2)

    assert out.shape == x.shape
    assert jnp.allclose(out, ref, atol=1e-5, rtol=1e-5), "mismatch vs reference"

    print("KERNEL_OK")
</pallas_src>

<mosaic_0001>
module attributes {stable_mosaic.version = 11 : i64} {
  func.func @_channel_attn_kernel(%arg0: i32, %arg1: memref<1x32x256xf32, #tpu.memory_space<vmem>>, %arg2: memref<32x2xf32, #tpu.memory_space<vmem>>, %arg3: memref<1x2xf32, #tpu.memory_space<vmem>>, %arg4: memref<2x32xf32, #tpu.memory_space<vmem>>, %arg5: memref<1x32xf32, #tpu.memory_space<vmem>>, %arg6: memref<1x32x256xf32, #tpu.memory_space<vmem>>) attributes {dimension_semantics = [#tpu.dimension_semantics<parallel>], iteration_bounds = array<i64: 2>, scalar_prefetch = 0 : i64, scratch_operands = 0 : i64, tpu.core_type = #tpu.core_type<tc>, window_params = [{transform_indices = @transform_0, window_bounds = array<i64: 1, 32, 256>}, {pipeline_mode = #tpu.pipeline_mode<synchronous>, transform_indices = @transform_1, window_bounds = array<i64: 32, 2>}, {pipeline_mode = #tpu.pipeline_mode<synchronous>, transform_indices = @transform_2, window_bounds = array<i64: 1, 2>}, {pipeline_mode = #tpu.pipeline_mode<synchronous>, transform_indices = @transform_3, window_bounds = array<i64: 2, 32>}, {pipeline_mode = #tpu.pipeline_mode<synchronous>, transform_indices = @transform_4, window_bounds = array<i64: 1, 32>}, {transform_indices = @transform_5, window_bounds = array<i64: 1, 32, 256>}]} {
    %c0 = arith.constant 0 : index
    %c0_0 = arith.constant 0 : index
    %c0_1 = arith.constant 0 : index
    %0 = vector.load %arg1[%c0, %c0_0, %c0_1] : memref<1x32x256xf32, #tpu.memory_space<vmem>>, vector<1x32x256xf32>
    %cst = arith.constant dense<0.000000e+00> : vector<1x32xf32>
    %1 = vector.multi_reduction <add>, %0, %cst [2] : vector<1x32x256xf32> to vector<1x32xf32>
    %cst_2 = arith.constant 3.906250e-03 : f32
    %2 = vector.broadcast %cst_2 : f32 to vector<1x32xf32>
    %3 = arith.mulf %1, %2 : vector<1x32xf32>
    %cst_3 = arith.constant dense<0xFF800000> : vector<1x32xf32>
    %4 = vector.multi_reduction <maximumf>, %0, %cst_3 [2] : vector<1x32x256xf32> to vector<1x32xf32>
    %5 = tpu.concatenate %3, %4 in 0 : vector<1x32xf32>, vector<1x32xf32> -> vector<2x32xf32>
    %c0_4 = arith.constant 0 : index
    %c0_5 = arith.constant 0 : index
    %6 = vector.load %arg2[%c0_4, %c0_5] : memref<32x2xf32, #tpu.memory_space<vmem>>, vector<32x2xf32>
    %c0_6 = arith.constant 0 : index
    %c0_7 = arith.constant 0 : index
    %7 = vector.load %arg3[%c0_6, %c0_7] : memref<1x2xf32, #tpu.memory_space<vmem>>, vector<1x2xf32>
    %c0_8 = arith.constant 0 : index
    %c0_9 = arith.constant 0 : index
    %8 = vector.load %arg4[%c0_8, %c0_9] : memref<2x32xf32, #tpu.memory_space<vmem>>, vector<2x32xf32>
    %c0_10 = arith.constant 0 : index
    %c0_11 = arith.constant 0 : index
    %9 = vector.load %arg5[%c0_10, %c0_11] : memref<1x32xf32, #tpu.memory_space<vmem>>, vector<1x32xf32>
    %cst_12 = arith.constant dense<0.000000e+00> : vector<2x2xf32>
    %10 = tpu.matmul %5, %6, %cst_12 {dimension_numbers = #tpu.dot_dimension_numbers<[1], [0], [0], [1], [0, 0, 1, 1], [], []>} : vector<2x32xf32>, vector<32x2xf32>, vector<2x2xf32> -> vector<2x2xf32>
    %11 = vector.broadcast %7 : vector<1x2xf32> to vector<2x2xf32>
    %12 = arith.addf %10, %11 : vector<2x2xf32>
    %cst_13 = arith.constant 0.000000e+00 : f32
    %13 = vector.broadcast %cst_13 : f32 to vector<2x2xf32>
    %14 = arith.maximumf %12, %13 : vector<2x2xf32>
    %cst_14 = arith.constant dense<0.000000e+00> : vector<2x32xf32>
    %15 = tpu.matmul %14, %8, %cst_14 {dimension_numbers = #tpu.dot_dimension_numbers<[1], [0], [0], [1], [0, 0, 1, 1], [], []>} : vector<2x2xf32>, vector<2x32xf32>, vector<2x32xf32> -> vector<2x32xf32>
    %16 = vector.broadcast %9 : vector<1x32xf32> to vector<2x32xf32>
    %17 = arith.addf %15, %16 : vector<2x32xf32>
    %18 = vector.extract_strided_slice %17 {offsets = [0, 0], sizes = [1, 32], strides = [1, 1]} : vector<2x32xf32> to vector<1x32xf32>
    %19 = vector.extract_strided_slice %17 {offsets = [1, 0], sizes = [1, 32], strides = [1, 1]} : vector<2x32xf32> to vector<1x32xf32>
    %20 = arith.addf %18, %19 : vector<1x32xf32>
    %21 = arith.negf %20 : vector<1x32xf32>
    %22 = math.exp %21 : vector<1x32xf32>
    %cst_15 = arith.constant 1.000000e+00 : f32
    %23 = vector.broadcast %cst_15 : f32 to vector<1x32xf32>
    %24 = arith.addf %23, %22 : vector<1x32xf32>
    %25 = arith.divf %23, %24 : vector<1x32xf32>
    %26 = vector.shape_cast %25 : vector<1x32xf32> to vector<1x32x1xf32>
    %27 = vector.broadcast %26 : vector<1x32x1xf32> to vector<1x32x256xf32>
    %28 = arith.mulf %0, %27 : vector<1x32x256xf32>
    %c0_16 = arith.constant 0 : index
    %c0_17 = arith.constant 0 : index
    %c0_18 = arith.constant 0 : index
    %29 = vector.load %arg6[%c0_16, %c0_17, %c0_18] : memref<1x32x256xf32, #tpu.memory_space<vmem>>, vector<1x32x256xf32>
    tpu.vector_store %arg6[%c0_16, %c0_17, %c0_18], %28 {strides = array<i32>} : memref<1x32x256xf32, #tpu.memory_space<vmem>>, vector<1x32x256xf32>,
    return
  }
  func.func @transform_0(%arg0: i32) -> (i32, i32, i32) {
    %c0_i32 = arith.constant 0 : i32
    %c0_i32_0 = arith.constant 0 : i32
    %c0_i32_1 = arith.constant 0 : i32
    return %arg0, %c0_i32, %c0_i32_0 : i32, i32, i32
  }
  func.func @transform_1(%arg0: i32) -> (i32, i32) {
    %c0_i32 = arith.constant 0 : i32
    %c0_i32_0 = arith.constant 0 : i32
    %c0_i32_1 = arith.constant 0 : i32
    return %c0_i32, %c0_i32_0 : i32, i32
  }
  func.func @transform_2(%arg0: i32) -> (i32, i32) {
    %c0_i32 = arith.constant 0 : i32
    %c0_i32_0 = arith.constant 0 : i32
    %c0_i32_1 = arith.constant 0 : i32
    return %c0_i32, %c0_i32_0 : i32, i32
  }
  func.func @transform_3(%arg0: i32) -> (i32, i32) {
    %c0_i32 = arith.constant 0 : i32
    %c0_i32_0 = arith.constant 0 : i32
    %c0_i32_1 = arith.constant 0 : i32
    return %c0_i32, %c0_i32_0 : i32, i32
  }
  func.func @transform_4(%arg0: i32) -> (i32, i32) {
    %c0_i32 = arith.constant 0 : i32
    %c0_i32_0 = arith.constant 0 : i32
    %c0_i32_1 = arith.constant 0 : i32
    return %c0_i32, %c0_i32_0 : i32, i32
  }
  func.func @transform_5(%arg0: i32) -> (i32, i32, i32) {
    %c0_i32 = arith.constant 0 : i32
    %c0_i32_0 = arith.constant 0 : i32
    %c0_i32_1 = arith.constant 0 : i32
    return %arg0, %c0_i32, %c0_i32_0 : i32, i32, i32
  }
}

</mosaic_0001>

<llo_original>
// kernel: tpu_custom_call.1
$region0: #{tpu_custom_call.1}
  #allocation0 [shape = 'u32[]', space=smem, size = 0x4, offset = 0x4, fixed_abs, tag = 'smem constant byte address 0x4 - core index']
  #allocation1 [shape = 'u32[144,128]{1,0:T(1,128)}', space=vmem, size = 0x12000, scoped, tag = 'internal scratch']
  %s0 = inlined_call_operand.hbm [shape: f32[2,32,256], index: 0, kind: input, shape index: {}]
  %s1 = inlined_call_operand.vmem [shape: f32[32,2], index: 1, kind: input, shape index: {}]
  %s2 = inlined_call_operand.vmem [shape: f32[1,2], index: 2, kind: input, shape index: {}]
  %s3 = inlined_call_operand.vmem [shape: f32[2,32], index: 3, kind: input, shape index: {}]
  %s4 = inlined_call_operand.vmem [shape: f32[1,32], index: 4, kind: input, shape index: {}]
  %s5 = inlined_call_operand.hbm [shape: f32[2,32,256], index: 5, kind: output, shape index: {}]
  %s6 = sld [smem:[#allocation0]]
  $region57: #{tpu_custom_call.1} parent=0
    _
  %s8 = ssub.s32 1, %s6
  %s9 = scalar_select 0, %s8, %s6
  $region1: #{tpu_custom_call.1} parent=0
    #allocation2 [shape = 'u8[65536]{0}', space=vmem, size = 0x10000, scoped, tag = 'input window, operand 0']
    #allocation3 [shape = 's32[2]{0}', space=sflag, size = 0x8, scoped, tag = 'scoped memory for tpu_custom_call.1']
    #allocation4 [shape = 's32[2]{0}', space=sflag, size = 0x8, scoped, tag = 'scoped memory for tpu_custom_call.1']
    #allocation5 [shape = 'u8[65536]{0}', space=vmem, size = 0x10000, scoped, tag = 'output window, operand 0']
    %10 = vsyncpa [#allocation3], 0
    %s11 = scalar_lea.sflag [#allocation3], 1
    %12 = vsyncpa %s11, 0
    %13 = vsyncpa [#allocation4], 0
    %s14 = scalar_lea.sflag [#allocation4], 1
    %15 = vsyncpa %s14, 0
    loop: start=0, step=1, limit=4
    $region2: #{tpu_custom_call.1} parent=1 // loop_pre_header
      _
    $region3: #{tpu_custom_call.1} parent=1 // loop_header
      %s17 = sphi 0, %s21
      %p18 = scmp.ge.s32.totalorder %s17, 4
      %s27 = sphi 0, %s29
      %s30 = sphi 0, %s27
      %s31 = sphi 0, %s30
      %s47 = sphi 0, %s31
      %s51 = sphi 0, %s51
      %s53 = sphi 0, %s51
      %s54 = sphi 0, %s53
      %s68 = sphi 0, %s54
      %s72 = sphi 0, %s72
      %s74 = sphi 0, %s72
      %s75 = sphi 0, %s74
      %s89 = sphi 0, %s75
      %s93 = sphi 0, %s93
      %s95 = sphi 0, %s93
      %s96 = sphi 0, %s95
      %s110 = sphi 0, %s96
      %s114 = sphi 0, %s114
      %s116 = sphi 0, %s114
      %s117 = sphi 0, %s116
      %s131 = sphi 0, %s117
      %s137 = sphi 0, %s139
      %s140 = sphi 0, %s137
      %s141 = sphi 0, %s140
      %s157 = sphi 0, %s141
    $region4: #{tpu_custom_call.1} parent=1 // loop_header_branch
      %20 = sbr.rel (%p18) target = $region8
    $region5: #{tpu_custom_call.1} parent=1 // loop_body
      %s22 = ssub.s32 %s17, 1
      %s23 = ssub.s32 %s17, 2
      %s24 = sadd.s32 %s17, 1
      %s25 = ssub.s32 %s17, %s24
      %p26 = scmp.eq.s32.totalorder %s25, 0
      %s28 = sadd.s32 %s27, 1
      %s29 = scalar_select %p26, %s27, %s28
      %p32 = pneg %p26
      %p33 = scmp.eq.s32.totalorder %s17, 1
      %p34 = por %p32, %p33
      %p35 = scmp.ne.s32.totalorder %s27, %s30
      %p36 = scmp.eq.s32.totalorder %s17, 0
      %p37 = por %p35, %p36
      %p38 = scmp.ne.s32.totalorder %s27, %s30
      %p39 = scmp.eq.s32.totalorder %s22, 1
      %p40 = por %p38, %p39
      %p41 = scmp.ne.s32.totalorder %s30, %s31
      %p42 = scmp.eq.s32.totalorder %s22, 0
      %p43 = por %p41, %p42
      %p44 = scmp.ne.s32.totalorder %s30, %s31
      %p45 = scmp.eq.s32.totalorder %s23, 1
      %p46 = por %p44, %p45
      %p48 = scmp.ne.s32.totalorder %s31, %s47
      %p49 = scmp.eq.s32.totalorder %s23, 0
      %p50 = por %p48, %p49
      %s52 = sadd.s32 %s51, 1
      %p55 = scmp.eq.s32.totalorder %s17, 1
      %p56 = scmp.ne.s32.totalorder %s51, %s53
      %p57 = scmp.eq.s32.totalorder %s17, 0
      %p58 = por %p56, %p57
      %p59 = scmp.ne.s32.totalorder %s51, %s53
      %p60 = scmp.eq.s32.totalorder %s22, 1
      %p61 = por %p59, %p60
      %p62 = scmp.ne.s32.totalorder %s53, %s54
      %p63 = scmp.eq.s32.totalorder %s22, 0
      %p64 = por %p62, %p63
      %p65 = scmp.ne.s32.totalorder %s53, %s54
      %p66 = scmp.eq.s32.totalorder %s23, 1
      %p67 = por %p65, %p66
      %p69 = scmp.ne.s32.totalorder %s54, %s68
      %p70 = scmp.eq.s32.totalorder %s23, 0
      %p71 = por %p69, %p70
      %s73 = sadd.s32 %s72, 1
      %p76 = scmp.eq.s32.totalorder %s17, 1
      %p77 = scmp.ne.s32.totalorder %s72, %s74
      %p78 = scmp.eq.s32.totalorder %s17, 0
      %p79 = por %p77, %p78
      %p80 = scmp.ne.s32.totalorder %s72, %s74
      %p81 = scmp.eq.s32.totalorder %s22, 1
      %p82 = por %p80, %p81
      %p83 = scmp.ne.s32.totalorder %s74, %s75
      %p84 = scmp.eq.s32.totalorder %s22, 0
      %p85 = por %p83, %p84
      %p86 = scmp.ne.s32.totalorder %s74, %s75
      %p87 = scmp.eq.s32.totalorder %s23, 1
      %p88 = por %p86, %p87
      %p90 = scmp.ne.s32.totalorder %s75, %s89
      %p91 = scmp.eq.s32.totalorder %s23, 0
      %p92 = por %p90, %p91
      %s94 = sadd.s32 %s93, 1
      %p97 = scmp.eq.s32.totalorder %s17, 1
      %p98 = scmp.ne.s32.totalorder %s93, %s95
      %p99 = scmp.eq.s32.totalorder %s17, 0
      %p100 = por %p98, %p99
      %p101 = scmp.ne.s32.totalorder %s93, %s95
      %p102 = scmp.eq.s32.totalorder %s22, 1
      %p103 = por %p101, %p102
      %p104 = scmp.ne.s32.totalorder %s95, %s96
      %p105 = scmp.eq.s32.totalorder %s22, 0
      %p106 = por %p104, %p105
      %p107 = scmp.ne.s32.totalorder %s95, %s96
      %p108 = scmp.eq.s32.totalorder %s23, 1
      %p109 = por %p107, %p108
      %p111 = scmp.ne.s32.totalorder %s96, %s110
      %p112 = scmp.eq.s32.totalorder %s23, 0
      %p113 = por %p111, %p112
      %s115 = sadd.s32 %s114, 1
      %p118 = scmp.eq.s32.totalorder %s17, 1
      %p119 = scmp.ne.s32.totalorder %s114, %s116
      %p120 = scmp.eq.s32.totalorder %s17, 0
      %p121 = por %p119, %p120
      %p122 = scmp.ne.s32.totalorder %s114, %s116
      %p123 = scmp.eq.s32.totalorder %s22, 1
      %p124 = por %p122, %p123
      %p125 = scmp.ne.s32.totalorder %s116, %s117
      %p126 = scmp.eq.s32.totalorder %s22, 0
      %p127 = por %p125, %p126
      %p128 = scmp.ne.s32.totalorder %s116, %s117
      %p129 = scmp.eq.s32.totalorder %s23, 1
      %p130 = por %p128, %p129
      %p132 = scmp.ne.s32.totalorder %s117, %s131
      %p133 = scmp.eq.s32.totalorder %s23, 0
      %p134 = por %p132, %p133
      %s135 = ssub.s32 %s17, %s24
      %p136 = scmp.eq.s32.totalorder %s135, 0
      %s138 = sadd.s32 %s137, 1
      %s139 = scalar_select %p136, %s137, %s138
      %p142 = pneg %p136
      %p143 = scmp.eq.s32.totalorder %s17, 1
      %p144 = por %p142, %p143
      %p145 = scmp.ne.s32.totalorder %s137, %s140
      %p146 = scmp.eq.s32.totalorder %s17, 0
      %p147 = por %p145, %p146
      %p148 = scmp.ne.s32.totalorder %s137, %s140
      %p149 = scmp.eq.s32.totalorder %s22, 1
      %p150 = por %p148, %p149
      %p151 = scmp.ne.s32.totalorder %s140, %s141
      %p152 = scmp.eq.s32.totalorder %s22, 0
      %p153 = por %p151, %p152
      %p154 = scmp.ne.s32.totalorder %s140, %s141
      %p155 = scmp.eq.s32.totalorder %s23, 1
      %p156 = por %p154, %p155
      %p158 = scmp.ne.s32.totalorder %s141, %s157
      %p159 = scmp.eq.s32.totalorder %s23, 0
      %p160 = por %p158, %p159
      %p161 = scmp.le.s32.totalorder 1, %s17
      %p162 = scmp.lt.s32.totalorder %s17, 3
      %p163 = pnand %p161, %p162
      %p164 = pneg %p163
      // Predicated region
      $region9: #{tpu_custom_call.1} parent=5 // pred_check
        _
      $region10: #{tpu_custom_call.1} parent=5 // pred_check_branch
        %166 = sbr.rel (%p163) target = $region12
      $region11: #{tpu_custom_call.1} parent=5 // pred_region
        %s167 = ssub.s32 %s17, 1
        // Predicated region
        $region13: #{tpu_custom_call.1} parent=11 // pred_check
          %p168 = pneg %p64
        $region14: #{tpu_custom_call.1} parent=11 // pred_check_branch
          %170 = sbr.rel (%p168) target = $region16
        $region15: #{tpu_custom_call.1} parent=11 // pred_region
          _
        $region16: #{tpu_custom_call.1} parent=11 // pred_fallthru
          _
        // Predicated region
        $region17: #{tpu_custom_call.1} parent=11 // pred_check
          %p171 = pneg %p85
        $region18: #{tpu_custom_call.1} parent=11 // pred_check_branch
          %173 = sbr.rel (%p171) target = $region20
        $region19: #{tpu_custom_call.1} parent=11 // pred_region
          _
        $region20: #{tpu_custom_call.1} parent=11 // pred_fallthru
          _
        // Predicated region
        $region21: #{tpu_custom_call.1} parent=11 // pred_check
          %p174 = pneg %p106
        $region22: #{tpu_custom_call.1} parent=11 // pred_check_branch
          %176 = sbr.rel (%p174) target = $region24
        $region23: #{tpu_custom_call.1} parent=11 // pred_region
          _
        $region24: #{tpu_custom_call.1} parent=11 // pred_fallthru
          _
        // Predicated region
        $region25: #{tpu_custom_call.1} parent=11 // pred_check
          %p177 = pneg %p127
        $region26: #{tpu_custom_call.1} parent=11 // pred_check_branch
          %179 = sbr.rel (%p177) target = $region28
        $region27: #{tpu_custom_call.1} parent=11 // pred_region
          _
        $region28: #{tpu_custom_call.1} parent=11 // pred_fallthru
          _
      $region12: #{tpu_custom_call.1} parent=5 // pred_fallthru
        _
      %p180 = scmp.lt.s32.totalorder %s17, 2
      // Predicated region
      $region29: #{tpu_custom_call.1} parent=5 // pred_check
        %p181 = pneg %p180
      $region30: #{tpu_custom_call.1} parent=5 // pred_check_branch
        %183 = sbr.rel (%p181) target = $region32
      $region31: #{tpu_custom_call.1} parent=5 // pred_region
        // Predicated region
        $region33: #{tpu_custom_call.1} parent=31 // pred_check
          %p184 = pneg %p37
        $region34: #{tpu_custom_call.1} parent=31 // pred_check_branch
          %186 = sbr.rel (%p184) target = $region36
        $region35: #{tpu_custom_call.1} parent=31 // pred_region
          %s187 = sand.u32 %s27, 1
          %s188 = scalar_lea.sflag [#allocation3], %s187
          %s189 = sand.u32 %s27, 1
          %s190 = smul.addr %s189, 64
          %s191 = scalar_lea.vmem [#allocation2], %s190
          %s193 = ssub.s32 1024, 1024
          %194 = vsyncadd %s188, %s193
          %s195 = smul.addr %s17, 8
          %s196 = smul.addr %s195, 128
          %s197 = scalar_lea.hbm %s0, %s196
          %s198 = sshll.u32 %s191, 4
          %s199 = int_to_ptr.vmem [resolvable:$true] %s198
          %204 = dma.hbm_to_vmem [thread:$0]  %s197, 1024, %s199, %s188, 256, 256, 16
        $region36: #{tpu_custom_call.1} parent=31 // pred_fallthru
          _
      $region32: #{tpu_custom_call.1} parent=5 // pred_fallthru
        _
      %p205 = scmp.le.s32.totalorder 1, %s17
      %p206 = scmp.lt.s32.totalorder %s17, 3
      %p207 = pnand %p205, %p206
      %p208 = pneg %p207
      // Predicated region
      $region37: #{tpu_custom_call.1} parent=5 // pred_check
        _
      $region38: #{tpu_custom_call.1} parent=5 // pred_check_branch
        %210 = sbr.rel (%p207) target = $region40
      $region39: #{tpu_custom_call.1} parent=5 // pred_region
        %s211 = ssub.s32 %s17, 1
        %s212 = sand.u32 %s30, 1
        %s213 = scalar_lea.sflag [#allocation3], %s212
        %s214 = sand.u32 %s30, 1
        %s215 = smul.addr %s214, 64
        %s216 = scalar_lea.vmem [#allocation2], %s215
        // Predicated region
        $region41: #{tpu_custom_call.1} parent=39 // pred_check
          %p217 = pneg %p43
        $region42: #{tpu_custom_call.1} parent=39 // pred_check_branch
          %219 = sbr.rel (%p217) target = $region44
        $region43: #{tpu_custom_call.1} parent=39 // pred_region
          %220 = dma.done %s213, 1024
        $region44: #{tpu_custom_call.1} parent=39 // pred_fallthru
          _
        %s221 = sand.u32 %s30, 1
        %s222 = scalar_lea.sflag [#allocation3], %s221
        %s223 = sand.u32 %s30, 1
        %s224 = smul.addr %s223, 64
        %s225 = scalar_lea.vmem [#allocation2], %s224
        %p226 = pneg %p43
        %p227 = pneg %p40
        %p228 = pneg %p64
        %p229 = pneg %p61
        %p230 = pneg %p85
        %p231 = pneg %p82
        %p232 = pneg %p106
        %p233 = pneg %p103
        %p234 = pneg %p127
        %p235 = pneg %p124
        %p236 = pneg %p153
        %p237 = pneg %p150
        %s238 = sand.u32 %s140, 1
        %s239 = scalar_lea.sflag [#allocation4], %s238
        %s240 = sand.u32 %s140, 1
        %s241 = smul.addr %s240, 64
        %s242 = scalar_lea.vmem [#allocation5], %s241
        %v243 = vld [vmem:[%s216] sm:$0xff]
        %v244 = vld [vmem:[%s216 + $0x8] sm:$0xff]
        %v245 = vld [vmem:[%s216 + $0x10] sm:$0xff]
        %v246 = vld [vmem:[%s216 + $0x18] sm:$0xff]
        %v247 = vld [vmem:[%s216 + $0x20] sm:$0xff]
        %v248 = vld [vmem:[%s216 + $0x28] sm:$0xff]
        %v249 = vld [vmem:[%s216 + $0x30] sm:$0xff]
        %v250 = vld [vmem:[%s216 + $0x38] sm:$0xff]
        %v251 = vadd.f32 %v243, %v244
        %252 = vadd.xlane.f32.xlu0 %v251
        %v253 = vpop.xlane.xlu0 %252
        %v254 = vadd.f32 %v245, %v246
        %255 = vadd.xlane.f32.xlu0 %v254
        %v256 = vpop.xlane.xlu0 %255
        %v257 = vadd.f32 %v247, %v248
        %258 = vadd.xlane.f32.xlu0 %v257
        %v259 = vpop.xlane.xlu0 %258
        %v260 = vadd.f32 %v249, %v250
        %261 = vadd.xlane.f32.xlu0 %v260
        %v262 = vpop.xlane.xlu0 %261
        %v263 = vmul.f32 %v253, 0.00390625
        %v264 = vmul.f32 %v256, 0.00390625
        %v265 = vmul.f32 %v259, 0.00390625
        %v266 = vmul.f32 %v262, 0.00390625
        %v267 = vmax.f32 %v243, %v244
        %268 = vmax.xlane.f32.xlu0 %v267
        %v269 = vpop.xlane.xlu0 %268
        %v270 = vmax.f32 %v245, %v246
        %271 = vmax.xlane.f32.xlu0 %v270
        %v272 = vpop.xlane.xlu0 %271
        %v273 = vmax.f32 %v247, %v248
        %274 = vmax.xlane.f32.xlu0 %v273
        %v275 = vpop.xlane.xlu0 %274
        %v276 = vmax.f32 %v249, %v250
        %277 = vmax.xlane.f32.xlu0 %v276
        %v278 = vpop.xlane.xlu0 %277
        %v283 = vlaneseq
        %v284 = vand.u32 %v283, 127
        %v285 = vlaneseq
        %v286 = vshrl.u32 %v285, 7
        %v287 = vsub.s32 %v284, %v286
        %v288 = vrot.slane %v263, %v287
        %v289 = vadd.s32 %v284, 4294967288
        %v290 = vlaneseq
        %v291 = vshrl.u32 %v290, 7
        %v292 = vsub.s32 %v289, %v291
        %v293 = vrot.slane %v264, %v292
        %vm294 = vcmask 130112
        %v295 = vsel %vm294, %v293, %v288
        %v296 = vadd.s32 %v284, 4294967280
        %v297 = vlaneseq
        %v298 = vshrl.u32 %v297, 7
        %v299 = vsub.s32 %v296, %v298
        %v300 = vrot.slane %v265, %v299
        %vm301 = vcmask 195712
        %v302 = vsel %vm301, %v300, %v295
        %v303 = vadd.s32 %v284, 4294967272
        %v304 = vlaneseq
        %v305 = vshrl.u32 %v304, 7
        %v306 = vsub.s32 %v303, %v305
        %v307 = vrot.slane %v266, %v306
        %vm308 = vcmask 261312
        %v309 = vsel %vm308, %v307, %v302
        %v315 = vlaneseq
        %v316 = vshrl.u32 %v315, 7
        %v317 = vsub.s32 %v284, %v316
        %v318 = vrot.slane %v269, %v317
        %v319 = vlaneseq
        %v320 = vshrl.u32 %v319, 7
        %v321 = vsub.s32 %v289, %v320
        %v322 = vrot.slane %v272, %v321
        %v323 = vsel %vm294, %v322, %v318
        %v324 = vlaneseq
        %v325 = vshrl.u32 %v324, 7
        %v326 = vsub.s32 %v296, %v325
        %v327 = vrot.slane %v275, %v326
        %v328 = vsel %vm301, %v327, %v323
        %v329 = vlaneseq
        %v330 = vshrl.u32 %v329, 7
        %v331 = vsub.s32 %v303, %v330
        %v332 = vrot.slane %v278, %v331
        %v333 = vsel %vm308, %v332, %v328
        %vm335 = vcmask 1040384
        %v336 = vsel %vm335, %v309, %v333
        %v337 = vld [vmem:[%s1] sm:$0xff]
        %v338 = vld [vmem:[%s1 + $0x8] sm:$0xff]
        %v339 = vld [vmem:[%s1 + $0x10] sm:$0xff]
        %v340 = vld [vmem:[%s1 + $0x18] sm:$0xff]
        %v341 = vld [vmem:[%s2] sm:$0x1]
        %v342 = vld [vmem:[%s3] sm:$0x3]
        %v343 = vld [vmem:[%s4] sm:$0x1]
        %v345 = vlaneseq
        %v346 = vshrl.u32 %v345, 7
        %v347 = vsub.s32 0, %v346
        %v348 = vrot.slane %v341, %v347
        %vm350 = vcmask 261120
        %v352 = vsel %vm350, %v336, 0
        %354 = vmatprep.subr.mxu0 0.0
        %355 = vmatpush1.msra.mxu0 %v337
        %356 = vmatprep.subr.mxu0 0.0
        %357 = vmatpush1.msra.mxu0 %v338
        %358 = vmatprep.subr.mxu0 0.0
        %359 = vmatpush1.msra.mxu0 %v339
        %360 = vmatprep.subr.mxu0 0.0
        %361 = vmatpush1.msra.mxu0 %v340
        %362 = vmatprep.subr.mxu0 0.0
        %363 = vmatpush1.msra.mxu0 0.0
        %364 = vmatprep.subr.mxu0 0.0
        %365 = vmatpush1.msra.mxu0 0.0
        %366 = vmatprep.subr.mxu0 0.0
        %367 = vmatpush1.msra.mxu0 0.0
        %368 = vmatprep.subr.mxu0 0.0
        %369 = vmatpush1.msra.mxu0 0.0
        %370 = vmatprep.subr.mxu0 0.0
        %371 = vmatpush1.msra.mxu0 0.0
        %372 = vmatprep.subr.mxu0 0.0
        %373 = vmatpush1.msra.mxu0 0.0
        %374 = vmatprep.subr.mxu0 0.0
        %375 = vmatpush1.msra.mxu0 0.0
        %376 = vmatprep.subr.mxu0 0.0
        %377 = vmatpush1.msra.mxu0 0.0
        %378 = vmatprep.subr.mxu0 0.0
        %379 = vmatpush1.msra.mxu0 0.0
        %380 = vmatprep.subr.mxu0 0.0
        %381 = vmatpush1.msra.mxu0 0.0
        %382 = vmatprep.subr.mxu0 0.0
        %383 = vmatpush1.msra.mxu0 0.0
        %384 = vmatprep.subr.mxu0 0.0
        %385 = vmatpush1.msra.mxu0 0.0
        %386 = vmatprep.subr.mxu0 0.0
        %387 = vmatpush1.msra.mxu0 0.0
        %388 = vmatprep.subr.mxu0 0.0
        %389 = vmatpush1.msra.mxu0 0.0
        %390 = vmatprep.subr.mxu0 0.0
        %391 = vmatpush1.msra.mxu0 0.0
        %392 = vmatprep.subr.mxu0 0.0
        %393 = vmatpush1.msra.mxu0 0.0
        %394 = vmatprep.subr.mxu0 0.0
        %395 = vmatpush1.msra.mxu0 0.0
        %396 = vmatprep.subr.mxu0 0.0
        %397 = vmatpush1.msra.mxu0 0.0
        %398 = vmatprep.subr.mxu0 0.0
        %399 = vmatpush1.msra.mxu0 0.0
        %400 = vmatprep.subr.mxu0 0.0
        %401 = vmatpush1.msra.mxu0 0.0
        %402 = vmatprep.subr.mxu0 0.0
        %403 = vmatpush1.msra.mxu0 0.0
        %404 = vmatprep.subr.mxu0 0.0
        %405 = vmatpush1.msra.mxu0 0.0
        %406 = vmatprep.subr.mxu0 0.0
        %407 = vmatpush1.msra.mxu0 0.0
        %408 = vmatprep.subr.mxu0 0.0
        %409 = vmatpush1.msra.mxu0 0.0
        %410 = vmatprep.subr.mxu0 0.0
        %411 = vmatpush1.msra.mxu0 0.0
        %412 = vmatprep.subr.mxu0 0.0
        %413 = vmatpush1.msra.mxu0 0.0
        %414 = vmatprep.subr.mxu0 0.0
        %415 = vmatpush1.msra.mxu0 0.0
        %416 = vmatprep.subr.mxu0 0.0
        %417 = vmatpush1.msra.mxu0 0.0
        %418 = vmatprep.mubr.f32.mxu0 0.0
        %419 = vmatmul.mubr.f32.gmra.mrb[0].mxu0 %v352
        %v420 = vpop.f32.mrb[0].mxu0
        %v421 = vadd.f32 %v348, %v420
        %v422 = vpop.f32.mrb[0].mxu0
        %423 = vdwg.mxu0
        %v424 = vmax.f32 %v421, 0.0
        %v426 = vlaneseq
        %v427 = vshrl.u32 %v426, 7
        %v428 = vsub.s32 0, %v427
        %v429 = vrot.slane %v343, %v428
        %vm431 = vcmask 15360
        %v433 = vsel %vm431, %v424, 0
        %vm435 = vcmask 1041408
        %v437 = vsel %vm435, %v342, 0
        %439 = vmatprep.subr.mxu0 0.0
        %440 = vmatpush1.msra.mxu0 %v437
        %441 = vmatprep.subr.mxu0 0.0
        %442 = vmatpush1.msra.mxu0 0.0
        %443 = vmatprep.subr.mxu0 0.0
        %444 = vmatpush1.msra.mxu0 0.0
        %445 = vmatprep.subr.mxu0 0.0
        %446 = vmatpush1.msra.mxu0 0.0
        %447 = vmatprep.subr.mxu0 0.0
        %448 = vmatpush1.msra.mxu0 0.0
        %449 = vmatprep.subr.mxu0 0.0
        %450 = vmatpush1.msra.mxu0 0.0
        %451 = vmatprep.subr.mxu0 0.0
        %452 = vmatpush1.msra.mxu0 0.0
        %453 = vmatprep.subr.mxu0 0.0
        %454 = vmatpush1.msra.mxu0 0.0
        %455 = vmatprep.subr.mxu0 0.0
        %456 = vmatpush1.msra.mxu0 0.0
        %457 = vmatprep.subr.mxu0 0.0
        %458 = vmatpush1.msra.mxu0 0.0
        %459 = vmatprep.subr.mxu0 0.0
        %460 = vmatpush1.msra.mxu0 0.0
        %461 = vmatprep.subr.mxu0 0.0
        %462 = vmatpush1.msra.mxu0 0.0
        %463 = vmatprep.subr.mxu0 0.0
        %464 = vmatpush1.msra.mxu0 0.0
        %465 = vmatprep.subr.mxu0 0.0
        %466 = vmatpush1.msra.mxu0 0.0
        %467 = vmatprep.subr.mxu0 0.0
        %468 = vmatpush1.msra.mxu0 0.0
        %469 = vmatprep.subr.mxu0 0.0
        %470 = vmatpush1.msra.mxu0 0.0
        %471 = vmatprep.subr.mxu0 0.0
        %472 = vmatpush1.msra.mxu0 0.0
        %473 = vmatprep.subr.mxu0 0.0
        %474 = vmatpush1.msra.mxu0 0.0
        %475 = vmatprep.subr.mxu0 0.0
        %476 = vmatpush1.msra.mxu0 0.0
        %477 = vmatprep.subr.mxu0 0.0
        %478 = vmatpush1.msra.mxu0 0.0
        %479 = vmatprep.subr.mxu0 0.0
        %480 = vmatpush1.msra.mxu0 0.0
        %481 = vmatprep.subr.mxu0 0.0
        %482 = vmatpush1.msra.mxu0 0.0
        %483 = vmatprep.subr.mxu0 0.0
        %484 = vmatpush1.msra.mxu0 0.0
        %485 = vmatprep.subr.mxu0 0.0
        %486 = vmatpush1.msra.mxu0 0.0
        %487 = vmatprep.subr.mxu0 0.0
        %488 = vmatpush1.msra.mxu0 0.0
        %489 = vmatprep.subr.mxu0 0.0
        %490 = vmatpush1.msra.mxu0 0.0
        %491 = vmatprep.subr.mxu0 0.0
        %492 = vmatpush1.msra.mxu0 0.0
        %493 = vmatprep.subr.mxu0 0.0
        %494 = vmatpush1.msra.mxu0 0.0
        %495 = vmatprep.subr.mxu0 0.0
        %496 = vmatpush1.msra.mxu0 0.0
        %497 = vmatprep.subr.mxu0 0.0
        %498 = vmatpush1.msra.mxu0 0.0
        %499 = vmatprep.subr.mxu0 0.0
        %500 = vmatpush1.msra.mxu0 0.0
        %501 = vmatprep.subr.mxu0 0.0
        %502 = vmatpush1.msra.mxu0 0.0
        %503 = vmatprep.mubr.f32.mxu0 0.0
        %504 = vmatmul.mubr.f32.gmra.mrb[0].mxu0 %v433
        %v505 = vpop.f32.mrb[0].mxu0
        %v506 = vadd.f32 %v429, %v505
        %v507 = vpop.f32.mrb[0].mxu0
        %508 = vdwg.mxu0
        %v510 = vrot.slane %v506, 1
        %v512 = vadd.f32 %v506, %v510
        %v513 = vxor.u32 %v512, 2147483648
        %v514 = vmul.f32 %v513, 1.442695
        %v515 = vpow.pop %v514
        %v516 = vadd.f32 %v515, 1.0
        %v517 = vrcp.pop %v516
        %v518 = vmul.f32 1.0, %v517
        %v519 = vlaneseq
        %v520 = vshrl.u32 %v519, 7
        %v521 = vsub.s32 0, %v520
        %v522 = vrot.slane %v518, %v521
        %524 = vbcast.lane.b32.xlu0 %v522, 256
        %v525 = vpop.permute.xlu0 %524
        %s527 = sor.u32 256, 8
        %528 = vbcast.lane.b32.xlu0 %v522, %s527
        %v529 = vpop.permute.xlu0 %528
        %s531 = sor.u32 256, 16
        %532 = vbcast.lane.b32.xlu0 %v522, %s531
        %v533 = vpop.permute.xlu0 %532
        %s535 = sor.u32 256, 24
        %536 = vbcast.lane.b32.xlu0 %v522, %s535
        %v537 = vpop.permute.xlu0 %536
        %v538 = vmul.f32 %v243, %v525
        %v539 = vmul.f32 %v244, %v525
        %v540 = vmul.f32 %v245, %v529
        %v541 = vmul.f32 %v246, %v529
        %v542 = vmul.f32 %v247, %v533
        %v543 = vmul.f32 %v248, %v533
        %v544 = vmul.f32 %v249, %v537
        %v545 = vmul.f32 %v250, %v537
        %546 = vst [vmem:[%s242] sm:$0xff] %v538
        %547 = vst [vmem:[%s242 + $0x8] sm:$0xff] %v539
        %548 = vst [vmem:[%s242 + $0x10] sm:$0xff] %v540
        %549 = vst [vmem:[%s242 + $0x18] sm:$0xff] %v541
        %550 = vst [vmem:[%s242 + $0x20] sm:$0xff] %v542
        %551 = vst [vmem:[%s242 + $0x28] sm:$0xff] %v543
        %552 = vst [vmem:[%s242 + $0x30] sm:$0xff] %v544
        %553 = vst [vmem:[%s242 + $0x38] sm:$0xff] %v545
        %s554 = sand.u32 %s140, 1
        %s555 = scalar_lea.sflag [#allocation4], %s554
        %s556 = sand.u32 %s140, 1
        %s557 = smul.addr %s556, 64
        %s558 = scalar_lea.vmem [#allocation5], %s557
        // Predicated region
        $region45: #{tpu_custom_call.1} parent=39 // pred_check
          %p559 = pneg %p150
        $region46: #{tpu_custom_call.1} parent=39 // pred_check_branch
          %561 = sbr.rel (%p559) target = $region48
        $region47: #{tpu_custom_call.1} parent=39 // pred_region
          %s563 = ssub.s32 1024, 1024
          %564 = vsyncadd %s555, %s563
          %s565 = smul.addr %s22, 8
          %s566 = smul.addr %s565, 128
          %s567 = scalar_lea.hbm %s5, %s566
          %s568 = sshll.u32 %s558, 4
          %s569 = int_to_ptr.vmem [resolvable:$true] %s568
          %574 = dma.vmem_to_hbm [thread:$0]  %s569, 1024, %s567, %s555, 256, 256, 16
        $region48: #{tpu_custom_call.1} parent=39 // pred_fallthru
          _
      $region40: #{tpu_custom_call.1} parent=5 // pred_fallthru
        _
      %p575 = scmp.le.s32.totalorder 2, %s17
      // Predicated region
      $region49: #{tpu_custom_call.1} parent=5 // pred_check
        %p576 = pneg %p575
      $region50: #{tpu_custom_call.1} parent=5 // pred_check_branch
        %578 = sbr.rel (%p576) target = $region52
      $region51: #{tpu_custom_call.1} parent=5 // pred_region
        %s579 = ssub.s32 %s17, 2
        // Predicated region
        $region53: #{tpu_custom_call.1} parent=51 // pred_check
          %p580 = pneg %p156
        $region54: #{tpu_custom_call.1} parent=51 // pred_check_branch
          %582 = sbr.rel (%p580) target = $region56
        $region55: #{tpu_custom_call.1} parent=51 // pred_region
          %s583 = sand.u32 %s141, 1
          %s584 = scalar_lea.sflag [#allocation4], %s583
          %s585 = sand.u32 %s141, 1
          %s586 = smul.addr %s585, 64
          %s587 = scalar_lea.vmem [#allocation5], %s586
          %588 = dma.done %s584, 1024
        $region56: #{tpu_custom_call.1} parent=51 // pred_fallthru
          _
      $region52: #{tpu_custom_call.1} parent=5 // pred_fallthru
        _
    $region6: #{tpu_custom_call.1} parent=1 // loop_footer
      %s21 = sadd.s32 1, %s17
    $region7: #{tpu_custom_call.1} parent=1 // loop_footer_branch
      %16 = sbr.rel target = $region3
    $region8: #{tpu_custom_call.1} parent=1 // loop_exit
      _
    %589 = vsyncpa [#allocation3], 1
    %s590 = scalar_lea.sflag [#allocation3], 1
    %591 = vsyncpa %s590, 1
    %592 = vsyncpa [#allocation4], 1
    %s593 = scalar_lea.sflag [#allocation4], 1
    %594 = vsyncpa %s593, 1

</llo_original>
